<compile_context>
chip_gen: v5e
topology: v5e:2x2
jax: 0.10.0
libtpu: 0.0.40
codegen_flags: <defaults>
</compile_context>

<pallas_src>
import jax
import jax.numpy as jnp
from jax import lax
from jax.experimental import pallas as pl
from jax.experimental.pallas import tpu as pltpu


def _round_up(x, m):
    return ((x + m - 1) // m) * m


# -----------------------------------------------------------------------------
# Path A: tiny vocab -> one-hot matmul on the MXU, table VMEM-resident.
# -----------------------------------------------------------------------------
def _embedding_onehot_kernel(ids_ref, w_ref, out_ref):
    # ids_ref : (TILE_T, 1)        int32 token ids for this tile
    # w_ref   : (n_V_pad, n_d_pad) embedding table (constant index_map -> VMEM resident)
    # out_ref : (TILE_T, n_d_pad)  gathered rows
    ids = ids_ref[...]                                        # (T, 1)
    tile_t = ids.shape[0]
    n_v = w_ref.shape[0]

    vocab_iota = lax.broadcasted_iota(jnp.int32, (tile_t, n_v), 1)
    one_hot = (vocab_iota == ids).astype(w_ref.dtype)         # (T, n_V_pad)

    # HIGHEST precision => multi-pass f32 MXU path: with a single non-zero term
    # per row this is (effectively) an exact row copy on v5e/v6e/v7x.
    out_ref[...] = jnp.dot(
        one_hot, w_ref[...],
        precision=lax.Precision.HIGHEST,
        preferred_element_type=jnp.float32,
    ).astype(out_ref.dtype)


# -----------------------------------------------------------------------------
# Path B: general vocab -> scalar-prefetched ids + manual HBM->VMEM row DMAs.
# -----------------------------------------------------------------------------
_GATHER_INFLIGHT = 8  # bounded number of outstanding row DMAs


def _embedding_gather_kernel(ids_ref, w_hbm, out_ref, sems):
    # ids_ref : (n_tok_pad,)        int32 in SMEM (scalar prefetch)
    # w_hbm   : (n_V_pad, n_d_pad)  table, memory_space=ANY (stays in HBM)
    # out_ref : (TILE_T, n_d_pad)   VMEM output tile -- DMA'd into directly
    # sems    : (_GATHER_INFLIGHT,) DMA semaphores (one per in-flight slot)
    tile_t = out_ref.shape[0]
    base = pl.program_id(0) * tile_t

    def row_copy(t, slot):
        row = ids_ref[base + t]
        return pltpu.make_async_copy(
            w_hbm.at[pl.ds(row, 1), :],
            out_ref.at[pl.ds(t, 1), :],
            sems.at[slot],
        )

    def step(t, carry):
        slot = t % _GATHER_INFLIGHT

        # Retire the copy issued _GATHER_INFLIGHT steps ago (same slot).
        @pl.when(t >= _GATHER_INFLIGHT)
        def _():
            row_copy(t - _GATHER_INFLIGHT, slot).wait()

        # Issue the next row copy.
        @pl.when(t < tile_t)
        def _():
            row_copy(t, slot).start()

        return carry

    # tile_t issues + tile_t waits; all rows have landed before block writeback.
    lax.fori_loop(0, tile_t + _GATHER_INFLIGHT, step, 0)


# -----------------------------------------------------------------------------
# Wrapper: pads the table once, dispatches between the two kernels.
# -----------------------------------------------------------------------------
class PallasEmbedding:
    """Pallas TPU replacement for EmbeddingLayer.forward: out = weight[ids]."""

    _ONEHOT_MAX_ROWS = 2048          # keep one-hot path only for tiny tables
    _ONEHOT_MAX_TABLE_BYTES = 8 << 20

    def __init__(self, weight, out_dtype=None):
        weight = jnp.asarray(weight)
        self.n_V, self.n_d = weight.shape
        self.dtype = weight.dtype
        self.out_dtype = jnp.dtype(out_dtype) if out_dtype is not None else weight.dtype

        # Pad ONCE (hoisted out of the per-call path): lane-dense feature dim,
        # vocab padded to 128 so the one-hot contraction dim fills the MXU.
        self.n_d_pad = _round_up(self.n_d, 128)
        self.n_V_pad = _round_up(self.n_V, 128)
        self.w_pad = (
            jnp.zeros((self.n_V_pad, self.n_d_pad), weight.dtype)
            .at[: self.n_V, : self.n_d]
            .set(weight)
        )
        self._table_bytes = self.n_V_pad * self.n_d_pad * self.w_pad.dtype.itemsize
        self._use_onehot = (
            self.n_V_pad <= self._ONEHOT_MAX_ROWS
            and self._table_bytes <= self._ONEHOT_MAX_TABLE_BYTES
        )
        if (not self._use_onehot) and self.out_dtype != self.dtype:
            # TODO(synk): bf16 output for the DMA-gather path would need a bf16
            # table copy or an extra cast pass; keep the table dtype there.
            self.out_dtype = self.dtype

    # ---- helpers -------------------------------------------------------------
    def _vmem_limit_bytes(self, tile):
        out_tile = tile * self.n_d_pad * jnp.dtype(self.out_dtype).itemsize
        ids_tile = tile * 4
        table = (2 * self._table_bytes) if self._use_onehot else 0
        need = table + 2 * out_tile + 2 * ids_tile
        return int(min(max(2 * need + (8 << 20), 16 << 20), 64 << 20))

    def _onehot_lookup(self, ids_pad, tile, n_tiles, single_buffer_table):
        n_V_pad, n_d_pad = self.w_pad.shape
        table_kwargs = {}
        if single_buffer_table:
            # Constant index_map => the block never changes; one buffer suffices.
            table_kwargs["pipeline_mode"] = pl.Buffered(1)
        table_spec = pl.BlockSpec((n_V_pad, n_d_pad), lambda i: (0, 0), **table_kwargs)

        grid_spec = pltpu.PrefetchScalarGridSpec(
            num_scalar_prefetch=0,
            grid=(n_tiles,),
            in_specs=[
                pl.BlockSpec((tile, 1), lambda i: (i, 0)),   # per-tile token ids
                table_spec,                                  # whole table, fetched once
            ],
            out_specs=pl.BlockSpec((tile, n_d_pad), lambda i: (i, 0)),
        )
        return pl.pallas_call(
            _embedding_onehot_kernel,
            out_shape=jax.ShapeDtypeStruct((n_tiles * tile, n_d_pad), self.out_dtype),
            grid_spec=grid_spec,
            compiler_params=pltpu.CompilerParams(
                dimension_semantics=("parallel",),
                vmem_limit_bytes=self._vmem_limit_bytes(tile),
            ),
        )(ids_pad, self.w_pad)

    def _gather_lookup(self, ids_pad, tile, n_tiles):
        n_d_pad = self.n_d_pad
        grid_spec = pltpu.PrefetchScalarGridSpec(
            num_scalar_prefetch=1,                           # ids -> SMEM
            grid=(n_tiles,),
            in_specs=[pl.BlockSpec(memory_space=pl.ANY)],    # table stays in HBM
            out_specs=pl.BlockSpec((tile, n_d_pad), lambda i, ids: (i, 0)),
            scratch_shapes=[pltpu.SemaphoreType.DMA((_GATHER_INFLIGHT,))],
        )
        return pl.pallas_call(
            _embedding_gather_kernel,
            out_shape=jax.ShapeDtypeStruct((n_tiles * tile, n_d_pad), self.out_dtype),
            grid_spec=grid_spec,
            compiler_params=pltpu.CompilerParams(
                dimension_semantics=("parallel",),
                vmem_limit_bytes=self._vmem_limit_bytes(tile),
            ),
        )(ids_pad, self.w_pad)

    # ---- forward -------------------------------------------------------------
    def __call__(self, ids, *, trim_output=True, tile_t=None):
        orig_shape = ids.shape
        # nn.Embedding would raise on OOB; on TPU clip to avoid a silent bad read.
        flat = jnp.clip(ids.reshape(-1).astype(jnp.int32), 0, self.n_V - 1)
        n_tok = flat.shape[0]

        tile = tile_t if tile_t is not None else (256 if self._use_onehot else 128)
        tile = _round_up(max(8, min(tile, _round_up(n_tok, 8))), 8)
        n_tok_pad = _round_up(n_tok, tile)
        n_tiles = n_tok_pad // tile

        if self._use_onehot:
            ids_pad = jnp.zeros((n_tok_pad, 1), jnp.int32).at[:n_tok, 0].set(flat)
            try:
                out = self._onehot_lookup(ids_pad, tile, n_tiles, single_buffer_table=True)
            except Exception:
                # pl.Buffered(1) not supported on this jax version -> default buffering.
                out = self._onehot_lookup(ids_pad, tile, n_tiles, single_buffer_table=False)
        else:
            ids_pad = jnp.zeros((n_tok_pad,), jnp.int32).at[:n_tok].set(flat)
            out = self._gather_lookup(ids_pad, tile, n_tiles)

        if trim_output:
            out = out[:n_tok, : self.n_d]
            return out.reshape(orig_shape + (self.n_d,))
        # Keep the 128-lane feature padding (avoids an extra depad copy downstream).
        return out[:n_tok].reshape(orig_shape + (self.n_d_pad,))


def make_embedding_weight(key, n_V, n_d, normalize=True):
    """Deterministic replica of EmbeddingLayer.__init__ parameter setup."""
    w = jax.random.uniform(key, (n_V, n_d), dtype=jnp.float32, minval=-0.25, maxval=0.25)
    if normalize:
        norms = jnp.linalg.norm(w, ord=2, axis=1, keepdims=True)
        w = w / norms
    return w


if __name__ == "__main__":
    key = jax.random.PRNGKey(0)
    k_w, k_ids, k_w2, k_ids2 = jax.random.split(key, 4)

    # ---- case 1: tiny vocab (62 words + <oov> + <pad> -> 64), module default n_d=100.
    #      Exercises the one-hot MXU path.
    n_V, n_d = 64, 100
    batch, seq = 2, 8
    weight = make_embedding_weight(k_w, n_V, n_d, normalize=True)
    emb = PallasEmbedding(weight)                      # table padded once here
    ids = jax.random.randint(k_ids, (batch, seq), 0, n_V, dtype=jnp.int32)

    out = jax.block_until_ready(emb(ids))
    ref = jnp.take(weight, ids, axis=0)
    assert out.shape == (batch, seq, n_d), out.shape
    assert out.dtype == jnp.float32, out.dtype
    assert jnp.allclose(out, ref, rtol=1e-6, atol=1e-6), "one-hot path mismatch"

    # ---- case 2: larger vocab -> exercises the scalable DMA row-gather path.
    n_V2, n_d2 = 5000, 128
    weight2 = make_embedding_weight(k_w2, n_V2, n_d2, normalize=True)
    emb2 = PallasEmbedding(weight2)
    ids2 = jax.random.randint(k_ids2, (4, 64), 0, n_V2, dtype=jnp.int32)

    out2 = jax.block_until_ready(emb2(ids2))
    ref2 = jnp.take(weight2, ids2, axis=0)
    assert out2.shape == (4, 64, n_d2), out2.shape
    assert jnp.array_equal(out2, ref2), "DMA-gather path mismatch"

    print("KERNEL_OK")
</pallas_src>

<mosaic_0001>
module attributes {stable_mosaic.version = 11 : i64} {
  func.func @_embedding_onehot_kernel(%arg0: i32, %arg1: memref<16x1xi32, #tpu.memory_space<vmem>>, %arg2: memref<128x128xf32, #tpu.memory_space<vmem>>, %arg3: memref<16x128xf32, #tpu.memory_space<vmem>>) attributes {dimension_semantics = [#tpu.dimension_semantics<parallel>], iteration_bounds = array<i64: 1>, scalar_prefetch = 0 : i64, scratch_operands = 0 : i64, tpu.core_type = #tpu.core_type<tc>, window_params = [{transform_indices = @transform_0, window_bounds = array<i64: 16, 1>}, {pipeline_mode = #tpu.pipeline_mode<synchronous>, transform_indices = @transform_1, window_bounds = array<i64: 128, 128>}, {transform_indices = @transform_2, window_bounds = array<i64: 16, 128>}]} {
    %c0 = arith.constant 0 : index
    %c0_0 = arith.constant 0 : index
    %0 = vector.load %arg1[%c0, %c0_0] : memref<16x1xi32, #tpu.memory_space<vmem>>, vector<16x1xi32>
    %1 = tpu.iota {dimensions = array<i32: 1>} : vector<16x128xi32>
    %2 = vector.broadcast %0 : vector<16x1xi32> to vector<16x128xi32>
    %3 = arith.cmpi eq, %1, %2 : vector<16x128xi32>
    %4 = arith.extui %3 : vector<16x128xi1> to vector<16x128xi32>
    %5 = arith.sitofp %4 : vector<16x128xi32> to vector<16x128xf32>
    %c0_1 = arith.constant 0 : index
    %c0_2 = arith.constant 0 : index
    %6 = vector.load %arg2[%c0_1, %c0_2] : memref<128x128xf32, #tpu.memory_space<vmem>>, vector<128x128xf32>
    %cst = arith.constant dense<0.000000e+00> : vector<16x128xf32>
    %7 = tpu.matmul %5, %6, %cst {dimension_numbers = #tpu.dot_dimension_numbers<[1], [0], [0], [1], [0, 0, 1, 1], [], []>, precision = #tpu.contract_precision<fp32>} : vector<16x128xf32>, vector<128x128xf32>, vector<16x128xf32> -> vector<16x128xf32>
    %c0_3 = arith.constant 0 : index
    %c0_4 = arith.constant 0 : index
    %8 = vector.load %arg3[%c0_3, %c0_4] : memref<16x128xf32, #tpu.memory_space<vmem>>, vector<16x128xf32>
    tpu.vector_store %arg3[%c0_3, %c0_4], %7 {strides = array<i32>} : memref<16x128xf32, #tpu.memory_space<vmem>>, vector<16x128xf32>,
    return
  }
  func.func @transform_0(%arg0: i32) -> (i32, i32) {
    %c0_i32 = arith.constant 0 : i32
    %c0_i32_0 = arith.constant 0 : i32
    return %arg0, %c0_i32 : i32, i32
  }
  func.func @transform_1(%arg0: i32) -> (i32, i32) {
    %c0_i32 = arith.constant 0 : i32
    %c0_i32_0 = arith.constant 0 : i32
    %c0_i32_1 = arith.constant 0 : i32
    return %c0_i32, %c0_i32_0 : i32, i32
  }
  func.func @transform_2(%arg0: i32) -> (i32, i32) {
    %c0_i32 = arith.constant 0 : i32
    %c0_i32_0 = arith.constant 0 : i32
    return %arg0, %c0_i32 : i32, i32
  }
}

module attributes {stable_mosaic.version = 11 : i64} {
  func.func @_embedding_onehot_kernel(%arg0: i32, %arg1: memref<16x1xi32, #tpu.memory_space<vmem>>, %arg2: memref<128x128xf32, #tpu.memory_space<vmem>>, %arg3: memref<16x128xf32, #tpu.memory_space<vmem>>) attributes {dimension_semantics = [#tpu.dimension_semantics<parallel>], iteration_bounds = array<i64: 1>, scalar_prefetch = 0 : i64, scratch_operands = 0 : i64, tpu.core_type = #tpu.core_type<tc>, window_params = [{transform_indices = @transform_0, window_bounds = array<i64: 16, 1>}, {pipeline_mode = #tpu.pipeline_mode<synchronous>, transform_indices = @transform_1, window_bounds = array<i64: 128, 128>}, {transform_indices = @transform_2, window_bounds = array<i64: 16, 128>}]} {
    %c0 = arith.constant 0 : index
    %c0_0 = arith.constant 0 : index
    %0 = vector.load %arg1[%c0, %c0_0] : memref<16x1xi32, #tpu.memory_space<vmem>>, vector<16x1xi32>
    %1 = tpu.iota {dimensions = array<i32: 1>} : vector<16x128xi32>
    %2 = vector.broadcast %0 : vector<16x1xi32> to vector<16x128xi32>
    %3 = arith.cmpi eq, %1, %2 : vector<16x128xi32>
    %4 = arith.extui %3 : vector<16x128xi1> to vector<16x128xi32>
    %5 = arith.sitofp %4 : vector<16x128xi32> to vector<16x128xf32>
    %c0_1 = arith.constant 0 : index
    %c0_2 = arith.constant 0 : index
    %6 = vector.load %arg2[%c0_1, %c0_2] : memref<128x128xf32, #tpu.memory_space<vmem>>, vector<128x128xf32>
    %cst = arith.constant dense<0.000000e+00> : vector<16x128xf32>
    %7 = tpu.matmul %5, %6, %cst {dimension_numbers = #tpu.dot_dimension_numbers<[1], [0], [0], [1], [0, 0, 1, 1], [], []>, precision = #tpu.contract_precision<fp32>} : vector<16x128xf32>, vector<128x128xf32>, vector<16x128xf32> -> vector<16x128xf32>
    %c0_3 = arith.constant 0 : index
    %c0_4 = arith.constant 0 : index
    %8 = vector.load %arg3[%c0_3, %c0_4] : memref<16x128xf32, #tpu.memory_space<vmem>>, vector<16x128xf32>
    tpu.vector_store %arg3[%c0_3, %c0_4], %7 {strides = array<i32>} : memref<16x128xf32, #tpu.memory_space<vmem>>, vector<16x128xf32>,
    return
  }
  func.func @transform_0(%arg0: i32) -> (i32, i32) {
    %c0_i32 = arith.constant 0 : i32
    %c0_i32_0 = arith.constant 0 : i32
    return %arg0, %c0_i32 : i32, i32
  }
  func.func @transform_1(%arg0: i32) -> (i32, i32) {
    %c0_i32 = arith.constant 0 : i32
    %c0_i32_0 = arith.constant 0 : i32
    %c0_i32_1 = arith.constant 0 : i32
    return %c0_i32, %c0_i32_0 : i32, i32
  }
  func.func @transform_2(%arg0: i32) -> (i32, i32) {
    %c0_i32 = arith.constant 0 : i32
    %c0_i32_0 = arith.constant 0 : i32
    return %arg0, %c0_i32 : i32, i32
  }
}

</mosaic_0001>

<llo_original>
// kernel: tpu_custom_call.1
$region0: #{tpu_custom_call.1}
  #allocation0 [shape = 'u32[]', space=smem, size = 0x4, offset = 0x4, fixed_abs, tag = 'smem constant byte address 0x4 - core index']
  #allocation1 [shape = 'u32[72,128]{1,0:T(1,128)}', space=vmem, size = 0x9000, scoped, tag = 'internal scratch']
  %s0 = inlined_call_operand.vmem [shape: s32[16,1], index: 0, kind: input, shape index: {}]
  %s1 = inlined_call_operand.hbm [shape: f32[128,128], index: 1, kind: input, shape index: {}]
  %s2 = inlined_call_operand.hbm [shape: f32[16,128], index: 2, kind: output, shape index: {}]
  %s3 = sld [smem:[#allocation0]]
  $region22: #{tpu_custom_call.1} parent=0
    _
  %s5 = ssub.s32 1, %s3
  %s6 = scalar_select 0, %s5, %s3
  $region1: #{tpu_custom_call.1} parent=0
    #allocation2 [shape = 'u8[65536]{0}', space=vmem, size = 0x10000, scoped, tag = 'input window, operand 1, single buffered']
    #allocation3 [shape = 's32[1]{0}', space=sflag, size = 0x4, scoped, tag = 'scoped memory for tpu_custom_call.1']
    #allocation4 [shape = 's32[1]{0}', space=sflag, size = 0x4, scoped, tag = 'scoped memory for tpu_custom_call.1']
    #allocation5 [shape = 'u8[8192]{0}', space=vmem, size = 0x2000, scoped, tag = 'output window, operand 0, single buffered']
    %7 = vsyncpa [#allocation3], 0
    %8 = vsyncpa [#allocation4], 0
    // Predicated region
    $region2: #{tpu_custom_call.1} parent=1 // pred_check
      _
    $region3: #{tpu_custom_call.1} parent=1 // pred_check_branch
      %10 = sbr.rel (0) target = $region5
    $region4: #{tpu_custom_call.1} parent=1 // pred_region
      _
    $region5: #{tpu_custom_call.1} parent=1 // pred_fallthru
      _
    // Predicated region
    $region6: #{tpu_custom_call.1} parent=1 // pred_check
      _
    $region7: #{tpu_custom_call.1} parent=1 // pred_check_branch
      %12 = sbr.rel (0) target = $region9
    $region8: #{tpu_custom_call.1} parent=1 // pred_region
      %14 = vsyncadd [#allocation3], 0
      %s15 = sshll.u32 %s1, 4
      %s16 = int_to_ptr.hbm [resolvable:$true] %s15
      %s17 = sshll.u32 [#allocation2], 4
      %s18 = int_to_ptr.vmem [resolvable:$true] %s17
      %23 = dma.hbm_to_vmem [thread:$0]  %s16, 2048, %s18, [#allocation3], 128, 128, 8
    $region9: #{tpu_custom_call.1} parent=1 // pred_fallthru
      _
    // Predicated region
    $region10: #{tpu_custom_call.1} parent=1 // pred_check
      _
    $region11: #{tpu_custom_call.1} parent=1 // pred_check_branch
      %25 = sbr.rel (0) target = $region13
    $region12: #{tpu_custom_call.1} parent=1 // pred_region
      %27 = dma.done [#allocation3], 2048
    $region13: #{tpu_custom_call.1} parent=1 // pred_fallthru
      _
    %v28 = vld [vmem:[%s0] sm:$0xff]
    %v29 = vld [vmem:[%s0 + $0x8] sm:$0xff]
    %v30 = vlaneseq
    %v31 = vand.u32 %v30, 127
    %32 = vset.pattern.permute.xlu0 0
    %33 = vperm.xlu0 %32, %v28
    %v34 = vpop.permute.xlu0 %33
    %35 = vset.pattern.permute.xlu0 0
    %36 = vperm.xlu0 %35, %v29
    %v37 = vpop.permute.xlu0 %36
    %vm38 = vcmp.eq.s32.totalorder %v31, %v34
    %vm39 = vcmp.eq.s32.totalorder %v31, %v37
    %v40 = vsel %vm38, 1, 0
    %v41 = vsel %vm39, 1, 0
    %v42 = vcvt.s32.f32 %v40
    %v43 = vcvt.s32.f32 %v41
    %v44 = vld [vmem:[#allocation2] sm:$0xff]
    %v45 = vld [vmem:[#allocation2 + $0x8] sm:$0xff]
    %v46 = vld [vmem:[#allocation2 + $0x10] sm:$0xff]
    %v47 = vld [vmem:[#allocation2 + $0x18] sm:$0xff]
    %v48 = vld [vmem:[#allocation2 + $0x20] sm:$0xff]
    %v49 = vld [vmem:[#allocation2 + $0x28] sm:$0xff]
    %v50 = vld [vmem:[#allocation2 + $0x30] sm:$0xff]
    %v51 = vld [vmem:[#allocation2 + $0x38] sm:$0xff]
    %v52 = vld [vmem:[#allocation2 + $0x40] sm:$0xff]
    %v53 = vld [vmem:[#allocation2 + $0x48] sm:$0xff]
    %v54 = vld [vmem:[#allocation2 + $0x50] sm:$0xff]
    %v55 = vld [vmem:[#allocation2 + $0x58] sm:$0xff]
    %v56 = vld [vmem:[#allocation2 + $0x60] sm:$0xff]
    %v57 = vld [vmem:[#allocation2 + $0x68] sm:$0xff]
    %v58 = vld [vmem:[#allocation2 + $0x70] sm:$0xff]
    %v59 = vld [vmem:[#allocation2 + $0x78] sm:$0xff]
    %v60 = vand.u32 %v59, 4294901760
    %61 = vmatpush.msra.mxu0 %v60
    %v62 = vand.u32 %v58, 4294901760
    %63 = vmatpush.msra.mxu0 %v62
    %v64 = vand.u32 %v57, 4294901760
    %65 = vmatpush.msra.mxu0 %v64
    %v66 = vand.u32 %v56, 4294901760
    %67 = vmatpush.msra.mxu0 %v66
    %v68 = vand.u32 %v55, 4294901760
    %69 = vmatpush.msra.mxu0 %v68
    %v70 = vand.u32 %v54, 4294901760
    %71 = vmatpush.msra.mxu0 %v70
    %v72 = vand.u32 %v53, 4294901760
    %73 = vmatpush.msra.mxu0 %v72
    %v74 = vand.u32 %v52, 4294901760
    %75 = vmatpush.msra.mxu0 %v74
    %v76 = vand.u32 %v51, 4294901760
    %77 = vmatpush.msra.mxu0 %v76
    %v78 = vand.u32 %v50, 4294901760
    %79 = vmatpush.msra.mxu0 %v78
    %v80 = vand.u32 %v49, 4294901760
    %81 = vmatpush.msra.mxu0 %v80
    %v82 = vand.u32 %v48, 4294901760
    %83 = vmatpush.msra.mxu0 %v82
    %v84 = vand.u32 %v47, 4294901760
    %85 = vmatpush.msra.mxu0 %v84
    %v86 = vand.u32 %v46, 4294901760
    %87 = vmatpush.msra.mxu0 %v86
    %v88 = vand.u32 %v45, 4294901760
    %89 = vmatpush.msra.mxu0 %v88
    %v90 = vand.u32 %v44, 4294901760
    %91 = vmatpush.msra.mxu0 %v90
    %v92 = vand.u32 %v42, 4294901760
    %v93 = vsub.f32 %v42, %v92
    %v94 = vand.u32 %v93, 4294901760
    %v95 = vsub.f32 %v93, %v94
    %v96 = vand.u32 %v95, 4294901760
    %97 = vmatmul.f32.gmra.mxu0 %v96
    %v98 = vpop.f32.mrf.mxu0
    %v99 = vadd.f32 0.0, %v98
    %v100 = vand.u32 %v43, 4294901760
    %v101 = vsub.f32 %v43, %v100
    %v102 = vand.u32 %v101, 4294901760
    %v103 = vsub.f32 %v101, %v102
    %v104 = vand.u32 %v103, 4294901760
    %105 = vmatmul.f32.gmra.mxu0 %v104
    %v106 = vpop.f32.mrf.mxu0
    %v107 = vadd.f32 0.0, %v106
    %108 = vdwg.mxu0
    %v109 = vand.u32 %v59, 4294901760
    %v110 = vsub.f32 %v59, %v109
    %v111 = vand.u32 %v110, 4294901760
    %v112 = vsub.f32 %v110, %v111
    %v113 = vand.u32 %v112, 4294901760
    %114 = vmatpush.msra.mxu0 %v113
    %v115 = vand.u32 %v58, 4294901760
    %v116 = vsub.f32 %v58, %v115
    %v117 = vand.u32 %v116, 4294901760
    %v118 = vsub.f32 %v116, %v117
    %v119 = vand.u32 %v118, 4294901760
    %120 = vmatpush.msra.mxu0 %v119
    %v121 = vand.u32 %v57, 4294901760
    %v122 = vsub.f32 %v57, %v121
    %v123 = vand.u32 %v122, 4294901760
    %v124 = vsub.f32 %v122, %v123
    %v125 = vand.u32 %v124, 4294901760
    %126 = vmatpush.msra.mxu0 %v125
    %v127 = vand.u32 %v56, 4294901760
    %v128 = vsub.f32 %v56, %v127
    %v129 = vand.u32 %v128, 4294901760
    %v130 = vsub.f32 %v128, %v129
    %v131 = vand.u32 %v130, 4294901760
    %132 = vmatpush.msra.mxu0 %v131
    %v133 = vand.u32 %v55, 4294901760
    %v134 = vsub.f32 %v55, %v133
    %v135 = vand.u32 %v134, 4294901760
    %v136 = vsub.f32 %v134, %v135
    %v137 = vand.u32 %v136, 4294901760
    %138 = vmatpush.msra.mxu0 %v137
    %v139 = vand.u32 %v54, 4294901760
    %v140 = vsub.f32 %v54, %v139
    %v141 = vand.u32 %v140, 4294901760
    %v142 = vsub.f32 %v140, %v141
    %v143 = vand.u32 %v142, 4294901760
    %144 = vmatpush.msra.mxu0 %v143
    %v145 = vand.u32 %v53, 4294901760
    %v146 = vsub.f32 %v53, %v145
    %v147 = vand.u32 %v146, 4294901760
    %v148 = vsub.f32 %v146, %v147
    %v149 = vand.u32 %v148, 4294901760
    %150 = vmatpush.msra.mxu0 %v149
    %v151 = vand.u32 %v52, 4294901760
    %v152 = vsub.f32 %v52, %v151
    %v153 = vand.u32 %v152, 4294901760
    %v154 = vsub.f32 %v152, %v153
    %v155 = vand.u32 %v154, 4294901760
    %156 = vmatpush.msra.mxu0 %v155
    %v157 = vand.u32 %v51, 4294901760
    %v158 = vsub.f32 %v51, %v157
    %v159 = vand.u32 %v158, 4294901760
    %v160 = vsub.f32 %v158, %v159
    %v161 = vand.u32 %v160, 4294901760
    %162 = vmatpush.msra.mxu0 %v161
    %v163 = vand.u32 %v50, 4294901760
    %v164 = vsub.f32 %v50, %v163
    %v165 = vand.u32 %v164, 4294901760
    %v166 = vsub.f32 %v164, %v165
    %v167 = vand.u32 %v166, 4294901760
    %168 = vmatpush.msra.mxu0 %v167
    %v169 = vand.u32 %v49, 4294901760
    %v170 = vsub.f32 %v49, %v169
    %v171 = vand.u32 %v170, 4294901760
    %v172 = vsub.f32 %v170, %v171
    %v173 = vand.u32 %v172, 4294901760
    %174 = vmatpush.msra.mxu0 %v173
    %v175 = vand.u32 %v48, 4294901760
    %v176 = vsub.f32 %v48, %v175
    %v177 = vand.u32 %v176, 4294901760
    %v178 = vsub.f32 %v176, %v177
    %v179 = vand.u32 %v178, 4294901760
    %180 = vmatpush.msra.mxu0 %v179
    %v181 = vand.u32 %v47, 4294901760
    %v182 = vsub.f32 %v47, %v181
    %v183 = vand.u32 %v182, 4294901760
    %v184 = vsub.f32 %v182, %v183
    %v185 = vand.u32 %v184, 4294901760
    %186 = vmatpush.msra.mxu0 %v185
    %v187 = vand.u32 %v46, 4294901760
    %v188 = vsub.f32 %v46, %v187
    %v189 = vand.u32 %v188, 4294901760
    %v190 = vsub.f32 %v188, %v189
    %v191 = vand.u32 %v190, 4294901760
    %192 = vmatpush.msra.mxu0 %v191
    %v193 = vand.u32 %v45, 4294901760
    %v194 = vsub.f32 %v45, %v193
    %v195 = vand.u32 %v194, 4294901760
    %v196 = vsub.f32 %v194, %v195
    %v197 = vand.u32 %v196, 4294901760
    %198 = vmatpush.msra.mxu0 %v197
    %v199 = vand.u32 %v44, 4294901760
    %v200 = vsub.f32 %v44, %v199
    %v201 = vand.u32 %v200, 4294901760
    %v202 = vsub.f32 %v200, %v201
    %v203 = vand.u32 %v202, 4294901760
    %204 = vmatpush.msra.mxu0 %v203
    %v205 = vand.u32 %v42, 4294901760
    %206 = vmatmul.f32.gmra.mxu0 %v205
    %v207 = vpop.f32.mrf.mxu0
    %v208 = vadd.f32 %v99, %v207
    %v209 = vand.u32 %v43, 4294901760
    %210 = vmatmul.f32.gmra.mxu0 %v209
    %v211 = vpop.f32.mrf.mxu0
    %v212 = vadd.f32 %v107, %v211
    %213 = vdwg.mxu0
    %v214 = vand.u32 %v59, 4294901760
    %v215 = vsub.f32 %v59, %v214
    %216 = vmatpush.msra.mxu0 %v215
    %v217 = vand.u32 %v58, 4294901760
    %v218 = vsub.f32 %v58, %v217
    %219 = vmatpush.msra.mxu0 %v218
    %v220 = vand.u32 %v57, 4294901760
    %v221 = vsub.f32 %v57, %v220
    %222 = vmatpush.msra.mxu0 %v221
    %v223 = vand.u32 %v56, 4294901760
    %v224 = vsub.f32 %v56, %v223
    %225 = vmatpush.msra.mxu0 %v224
    %v226 = vand.u32 %v55, 4294901760
    %v227 = vsub.f32 %v55, %v226
    %228 = vmatpush.msra.mxu0 %v227
    %v229 = vand.u32 %v54, 4294901760
    %v230 = vsub.f32 %v54, %v229
    %231 = vmatpush.msra.mxu0 %v230
    %v232 = vand.u32 %v53, 4294901760
    %v233 = vsub.f32 %v53, %v232
    %234 = vmatpush.msra.mxu0 %v233
    %v235 = vand.u32 %v52, 4294901760
    %v236 = vsub.f32 %v52, %v235
    %237 = vmatpush.msra.mxu0 %v236
    %v238 = vand.u32 %v51, 4294901760
    %v239 = vsub.f32 %v51, %v238
    %240 = vmatpush.msra.mxu0 %v239
    %v241 = vand.u32 %v50, 4294901760
    %v242 = vsub.f32 %v50, %v241
    %243 = vmatpush.msra.mxu0 %v242
    %v244 = vand.u32 %v49, 4294901760
    %v245 = vsub.f32 %v49, %v244
    %246 = vmatpush.msra.mxu0 %v245
    %v247 = vand.u32 %v48, 4294901760
    %v248 = vsub.f32 %v48, %v247
    %249 = vmatpush.msra.mxu0 %v248
    %v250 = vand.u32 %v47, 4294901760
    %v251 = vsub.f32 %v47, %v250
    %252 = vmatpush.msra.mxu0 %v251
    %v253 = vand.u32 %v46, 4294901760
    %v254 = vsub.f32 %v46, %v253
    %255 = vmatpush.msra.mxu0 %v254
    %v256 = vand.u32 %v45, 4294901760
    %v257 = vsub.f32 %v45, %v256
    %258 = vmatpush.msra.mxu0 %v257
    %v259 = vand.u32 %v44, 4294901760
    %v260 = vsub.f32 %v44, %v259
    %261 = vmatpush.msra.mxu0 %v260
    %v262 = vand.u32 %v42, 4294901760
    %v263 = vsub.f32 %v42, %v262
    %264 = vmatmul.f32.gmra.mxu0 %v263
    %v265 = vpop.f32.mrf.mxu0
    %v266 = vadd.f32 %v208, %v265
    %v267 = vand.u32 %v43, 4294901760
    %v268 = vsub.f32 %v43, %v267
    %269 = vmatmul.f32.gmra.mxu0 %v268
    %v270 = vpop.f32.mrf.mxu0
    %v271 = vadd.f32 %v212, %v270
    %272 = vdwg.mxu0
    %v273 = vand.u32 %v59, 4294901760
    %274 = vmatpush.msra.mxu0 %v273
    %v275 = vand.u32 %v58, 4294901760
    %276 = vmatpush.msra.mxu0 %v275
    %v277 = vand.u32 %v57, 4294901760
    %278 = vmatpush.msra.mxu0 %v277
    %v279 = vand.u32 %v56, 4294901760
    %280 = vmatpush.msra.mxu0 %v279
    %v281 = vand.u32 %v55, 4294901760
    %282 = vmatpush.msra.mxu0 %v281
    %v283 = vand.u32 %v54, 4294901760
    %284 = vmatpush.msra.mxu0 %v283
    %v285 = vand.u32 %v53, 4294901760
    %286 = vmatpush.msra.mxu0 %v285
    %v287 = vand.u32 %v52, 4294901760
    %288 = vmatpush.msra.mxu0 %v287
    %v289 = vand.u32 %v51, 4294901760
    %290 = vmatpush.msra.mxu0 %v289
    %v291 = vand.u32 %v50, 4294901760
    %292 = vmatpush.msra.mxu0 %v291
    %v293 = vand.u32 %v49, 4294901760
    %294 = vmatpush.msra.mxu0 %v293
    %v295 = vand.u32 %v48, 4294901760
    %296 = vmatpush.msra.mxu0 %v295
    %v297 = vand.u32 %v47, 4294901760
    %298 = vmatpush.msra.mxu0 %v297
    %v299 = vand.u32 %v46, 4294901760
    %300 = vmatpush.msra.mxu0 %v299
    %v301 = vand.u32 %v45, 4294901760
    %302 = vmatpush.msra.mxu0 %v301
    %v303 = vand.u32 %v44, 4294901760
    %304 = vmatpush.msra.mxu0 %v303
    %v305 = vand.u32 %v42, 4294901760
    %v306 = vsub.f32 %v42, %v305
    %v307 = vand.u32 %v306, 4294901760
    %308 = vmatmul.f32.gmra.mxu0 %v307
    %v309 = vpop.f32.mrf.mxu0
    %v310 = vadd.f32 %v266, %v309
    %v311 = vand.u32 %v43, 4294901760
    %v312 = vsub.f32 %v43, %v311
    %v313 = vand.u32 %v312, 4294901760
    %314 = vmatmul.f32.gmra.mxu0 %v313
    %v315 = vpop.f32.mrf.mxu0
    %v316 = vadd.f32 %v271, %v315
    %317 = vdwg.mxu0
    %v318 = vand.u32 %v59, 4294901760
    %v319 = vsub.f32 %v59, %v318
    %v320 = vand.u32 %v319, 4294901760
    %321 = vmatpush.msra.mxu0 %v320
    %v322 = vand.u32 %v58, 4294901760
    %v323 = vsub.f32 %v58, %v322
    %v324 = vand.u32 %v323, 4294901760
    %325 = vmatpush.msra.mxu0 %v324
    %v326 = vand.u32 %v57, 4294901760
    %v327 = vsub.f32 %v57, %v326
    %v328 = vand.u32 %v327, 4294901760
    %329 = vmatpush.msra.mxu0 %v328
    %v330 = vand.u32 %v56, 4294901760
    %v331 = vsub.f32 %v56, %v330
    %v332 = vand.u32 %v331, 4294901760
    %333 = vmatpush.msra.mxu0 %v332
    %v334 = vand.u32 %v55, 4294901760
    %v335 = vsub.f32 %v55, %v334
    %v336 = vand.u32 %v335, 4294901760
    %337 = vmatpush.msra.mxu0 %v336
    %v338 = vand.u32 %v54, 4294901760
    %v339 = vsub.f32 %v54, %v338
    %v340 = vand.u32 %v339, 4294901760
    %341 = vmatpush.msra.mxu0 %v340
    %v342 = vand.u32 %v53, 4294901760
    %v343 = vsub.f32 %v53, %v342
    %v344 = vand.u32 %v343, 4294901760
    %345 = vmatpush.msra.mxu0 %v344
    %v346 = vand.u32 %v52, 4294901760
    %v347 = vsub.f32 %v52, %v346
    %v348 = vand.u32 %v347, 4294901760
    %349 = vmatpush.msra.mxu0 %v348
    %v350 = vand.u32 %v51, 4294901760
    %v351 = vsub.f32 %v51, %v350
    %v352 = vand.u32 %v351, 4294901760
    %353 = vmatpush.msra.mxu0 %v352
    %v354 = vand.u32 %v50, 4294901760
    %v355 = vsub.f32 %v50, %v354
    %v356 = vand.u32 %v355, 4294901760
    %357 = vmatpush.msra.mxu0 %v356
    %v358 = vand.u32 %v49, 4294901760
    %v359 = vsub.f32 %v49, %v358
    %v360 = vand.u32 %v359, 4294901760
    %361 = vmatpush.msra.mxu0 %v360
    %v362 = vand.u32 %v48, 4294901760
    %v363 = vsub.f32 %v48, %v362
    %v364 = vand.u32 %v363, 4294901760
    %365 = vmatpush.msra.mxu0 %v364
    %v366 = vand.u32 %v47, 4294901760
    %v367 = vsub.f32 %v47, %v366
    %v368 = vand.u32 %v367, 4294901760
    %369 = vmatpush.msra.mxu0 %v368
    %v370 = vand.u32 %v46, 4294901760
    %v371 = vsub.f32 %v46, %v370
    %v372 = vand.u32 %v371, 4294901760
    %373 = vmatpush.msra.mxu0 %v372
    %v374 = vand.u32 %v45, 4294901760
    %v375 = vsub.f32 %v45, %v374
    %v376 = vand.u32 %v375, 4294901760
    %377 = vmatpush.msra.mxu0 %v376
    %v378 = vand.u32 %v44, 4294901760
    %v379 = vsub.f32 %v44, %v378
    %v380 = vand.u32 %v379, 4294901760
    %381 = vmatpush.msra.mxu0 %v380
    %v382 = vand.u32 %v42, 4294901760
    %383 = vmatmul.f32.gmra.mxu0 %v382
    %v384 = vpop.f32.mrf.mxu0
    %v385 = vadd.f32 %v310, %v384
    %v386 = vand.u32 %v43, 4294901760
    %387 = vmatmul.f32.gmra.mxu0 %v386
    %v388 = vpop.f32.mrf.mxu0
    %v389 = vadd.f32 %v316, %v388
    %390 = vdwg.mxu0
    %v391 = vand.u32 %v59, 4294901760
    %392 = vmatpush.msra.mxu0 %v391
    %v393 = vand.u32 %v58, 4294901760
    %394 = vmatpush.msra.mxu0 %v393
    %v395 = vand.u32 %v57, 4294901760
    %396 = vmatpush.msra.mxu0 %v395
    %v397 = vand.u32 %v56, 4294901760
    %398 = vmatpush.msra.mxu0 %v397
    %v399 = vand.u32 %v55, 4294901760
    %400 = vmatpush.msra.mxu0 %v399
    %v401 = vand.u32 %v54, 4294901760
    %402 = vmatpush.msra.mxu0 %v401
    %v403 = vand.u32 %v53, 4294901760
    %404 = vmatpush.msra.mxu0 %v403
    %v405 = vand.u32 %v52, 4294901760
    %406 = vmatpush.msra.mxu0 %v405
    %v407 = vand.u32 %v51, 4294901760
    %408 = vmatpush.msra.mxu0 %v407
    %v409 = vand.u32 %v50, 4294901760
    %410 = vmatpush.msra.mxu0 %v409
    %v411 = vand.u32 %v49, 4294901760
    %412 = vmatpush.msra.mxu0 %v411
    %v413 = vand.u32 %v48, 4294901760
    %414 = vmatpush.msra.mxu0 %v413
    %v415 = vand.u32 %v47, 4294901760
    %416 = vmatpush.msra.mxu0 %v415
    %v417 = vand.u32 %v46, 4294901760
    %418 = vmatpush.msra.mxu0 %v417
    %v419 = vand.u32 %v45, 4294901760
    %420 = vmatpush.msra.mxu0 %v419
    %v421 = vand.u32 %v44, 4294901760
    %422 = vmatpush.msra.mxu0 %v421
    %v423 = vand.u32 %v42, 4294901760
    %424 = vmatmul.f32.gmra.mxu0 %v423
    %v425 = vpop.f32.mrf.mxu0
    %v426 = vadd.f32 %v385, %v425
    %v427 = vand.u32 %v43, 4294901760
    %428 = vmatmul.f32.gmra.mxu0 %v427
    %v429 = vpop.f32.mrf.mxu0
    %v430 = vadd.f32 %v389, %v429
    %431 = vdwg.mxu0
    %432 = vst [vmem:[#allocation5] sm:$0xff] %v426
    %433 = vst [vmem:[#allocation5 + $0x8] sm:$0xff] %v430
    // Predicated region
    $region14: #{tpu_custom_call.1} parent=1 // pred_check
      _
    $region15: #{tpu_custom_call.1} parent=1 // pred_check_branch
      %435 = sbr.rel (0) target = $region17
    $region16: #{tpu_custom_call.1} parent=1 // pred_region
      %437 = vsyncadd [#allocation4], 0
      %s438 = sshll.u32 [#allocation5], 4
      %s439 = int_to_ptr.vmem [resolvable:$true] %s438
      %s440 = sshll.u32 %s2, 4
      %s441 = int_to_ptr.hbm [resolvable:$true] %s440
      %446 = dma.vmem_to_hbm [thread:$0]  %s439, 256, %s441, [#allocation4], 128, 128, 8
    $region17: #{tpu_custom_call.1} parent=1 // pred_fallthru
      _
    // Predicated region
    $region18: #{tpu_custom_call.1} parent=1 // pred_check
      _
    $region19: #{tpu_custom_call.1} parent=1 // pred_check_branch
      %448 = sbr.rel (0) target = $region21
    $region20: #{tpu_custom_call.1} parent=1 // pred_region
      %450 = dma.done [#allocation4], 256
    $region21: #{tpu_custom_call.1} parent=1 // pred_fallthru
      _
    %451 = vsyncpa [#allocation3], 1
    %452 = vsyncpa [#allocation4], 1

// kernel: tpu_custom_call.1
$region0: #{tpu_custom_call.1}
  #allocation0 [shape = 'u32[]', space=smem, size = 0x4, offset = 0x4, fixed_abs, tag = 'smem constant byte address 0x4 - core index']
  #allocation1 [shape = 'u32[72,128]{1,0:T(1,128)}', space=vmem, size = 0x9000, scoped, tag = 'internal scratch']
  %s0 = inlined_call_operand.vmem [shape: s32[16,1], index: 0, kind: input, shape index: {}]
  %s1 = inlined_call_operand.hbm [shape: f32[128,128], index: 1, kind: input, shape index: {}]
  %s2 = inlined_call_operand.hbm [shape: f32[16,128], index: 2, kind: output, shape index: {}]
  %s3 = sld [smem:[#allocation0]]
  $region22: #{tpu_custom_call.1} parent=0
    _
  %s5 = ssub.s32 1, %s3
  %s6 = scalar_select 0, %s5, %s3
  $region1: #{tpu_custom_call.1} parent=0
    #allocation2 [shape = 'u8[65536]{0}', space=vmem, size = 0x10000, scoped, tag = 'input window, operand 1, single buffered']
    #allocation3 [shape = 's32[1]{0}', space=sflag, size = 0x4, scoped, tag = 'scoped memory for tpu_custom_call.1']
    #allocation4 [shape = 's32[1]{0}', space=sflag, size = 0x4, scoped, tag = 'scoped memory for tpu_custom_call.1']
    #allocation5 [shape = 'u8[8192]{0}', space=vmem, size = 0x2000, scoped, tag = 'output window, operand 0, single buffered']
    %7 = vsyncpa [#allocation3], 0
    %8 = vsyncpa [#allocation4], 0
    // Predicated region
    $region2: #{tpu_custom_call.1} parent=1 // pred_check
      _
    $region3: #{tpu_custom_call.1} parent=1 // pred_check_branch
      %10 = sbr.rel (0) target = $region5
    $region4: #{tpu_custom_call.1} parent=1 // pred_region
      _
    $region5: #{tpu_custom_call.1} parent=1 // pred_fallthru
      _
    // Predicated region
    $region6: #{tpu_custom_call.1} parent=1 // pred_check
      _
    $region7: #{tpu_custom_call.1} parent=1 // pred_check_branch
      %12 = sbr.rel (0) target = $region9
    $region8: #{tpu_custom_call.1} parent=1 // pred_region
      %14 = vsyncadd [#allocation3], 0
      %s15 = sshll.u32 %s1, 4
      %s16 = int_to_ptr.hbm [resolvable:$true] %s15
      %s17 = sshll.u32 [#allocation2], 4
      %s18 = int_to_ptr.vmem [resolvable:$true] %s17
      %23 = dma.hbm_to_vmem [thread:$0]  %s16, 2048, %s18, [#allocation3], 128, 128, 8
    $region9: #{tpu_custom_call.1} parent=1 // pred_fallthru
      _
    // Predicated region
    $region10: #{tpu_custom_call.1} parent=1 // pred_check
      _
    $region11: #{tpu_custom_call.1} parent=1 // pred_check_branch
      %25 = sbr.rel (0) target = $region13
    $region12: #{tpu_custom_call.1} parent=1 // pred_region
      %27 = dma.done [#allocation3], 2048
    $region13: #{tpu_custom_call.1} parent=1 // pred_fallthru
      _
    %v28 = vld [vmem:[%s0] sm:$0xff]
    %v29 = vld [vmem:[%s0 + $0x8] sm:$0xff]
    %v30 = vlaneseq
    %v31 = vand.u32 %v30, 127
    %32 = vset.pattern.permute.xlu0 0
    %33 = vperm.xlu0 %32, %v28
    %v34 = vpop.permute.xlu0 %33
    %35 = vset.pattern.permute.xlu0 0
    %36 = vperm.xlu0 %35, %v29
    %v37 = vpop.permute.xlu0 %36
    %vm38 = vcmp.eq.s32.totalorder %v31, %v34
    %vm39 = vcmp.eq.s32.totalorder %v31, %v37
    %v40 = vsel %vm38, 1, 0
    %v41 = vsel %vm39, 1, 0
    %v42 = vcvt.s32.f32 %v40
    %v43 = vcvt.s32.f32 %v41
    %v44 = vld [vmem:[#allocation2] sm:$0xff]
    %v45 = vld [vmem:[#allocation2 + $0x8] sm:$0xff]
    %v46 = vld [vmem:[#allocation2 + $0x10] sm:$0xff]
    %v47 = vld [vmem:[#allocation2 + $0x18] sm:$0xff]
    %v48 = vld [vmem:[#allocation2 + $0x20] sm:$0xff]
    %v49 = vld [vmem:[#allocation2 + $0x28] sm:$0xff]
    %v50 = vld [vmem:[#allocation2 + $0x30] sm:$0xff]
    %v51 = vld [vmem:[#allocation2 + $0x38] sm:$0xff]
    %v52 = vld [vmem:[#allocation2 + $0x40] sm:$0xff]
    %v53 = vld [vmem:[#allocation2 + $0x48] sm:$0xff]
    %v54 = vld [vmem:[#allocation2 + $0x50] sm:$0xff]
    %v55 = vld [vmem:[#allocation2 + $0x58] sm:$0xff]
    %v56 = vld [vmem:[#allocation2 + $0x60] sm:$0xff]
    %v57 = vld [vmem:[#allocation2 + $0x68] sm:$0xff]
    %v58 = vld [vmem:[#allocation2 + $0x70] sm:$0xff]
    %v59 = vld [vmem:[#allocation2 + $0x78] sm:$0xff]
    %v60 = vand.u32 %v59, 4294901760
    %61 = vmatpush.msra.mxu0 %v60
    %v62 = vand.u32 %v58, 4294901760
    %63 = vmatpush.msra.mxu0 %v62
    %v64 = vand.u32 %v57, 4294901760
    %65 = vmatpush.msra.mxu0 %v64
    %v66 = vand.u32 %v56, 4294901760
    %67 = vmatpush.msra.mxu0 %v66
    %v68 = vand.u32 %v55, 4294901760
    %69 = vmatpush.msra.mxu0 %v68
    %v70 = vand.u32 %v54, 4294901760
    %71 = vmatpush.msra.mxu0 %v70
    %v72 = vand.u32 %v53, 4294901760
    %73 = vmatpush.msra.mxu0 %v72
    %v74 = vand.u32 %v52, 4294901760
    %75 = vmatpush.msra.mxu0 %v74
    %v76 = vand.u32 %v51, 4294901760
    %77 = vmatpush.msra.mxu0 %v76
    %v78 = vand.u32 %v50, 4294901760
    %79 = vmatpush.msra.mxu0 %v78
    %v80 = vand.u32 %v49, 4294901760
    %81 = vmatpush.msra.mxu0 %v80
    %v82 = vand.u32 %v48, 4294901760
    %83 = vmatpush.msra.mxu0 %v82
    %v84 = vand.u32 %v47, 4294901760
    %85 = vmatpush.msra.mxu0 %v84
    %v86 = vand.u32 %v46, 4294901760
    %87 = vmatpush.msra.mxu0 %v86
    %v88 = vand.u32 %v45, 4294901760
    %89 = vmatpush.msra.mxu0 %v88
    %v90 = vand.u32 %v44, 4294901760
    %91 = vmatpush.msra.mxu0 %v90
    %v92 = vand.u32 %v42, 4294901760
    %v93 = vsub.f32 %v42, %v92
    %v94 = vand.u32 %v93, 4294901760
    %v95 = vsub.f32 %v93, %v94
    %v96 = vand.u32 %v95, 4294901760
    %97 = vmatmul.f32.gmra.mxu0 %v96
    %v98 = vpop.f32.mrf.mxu0
    %v99 = vadd.f32 0.0, %v98
    %v100 = vand.u32 %v43, 4294901760
    %v101 = vsub.f32 %v43, %v100
    %v102 = vand.u32 %v101, 4294901760
    %v103 = vsub.f32 %v101, %v102
    %v104 = vand.u32 %v103, 4294901760
    %105 = vmatmul.f32.gmra.mxu0 %v104
    %v106 = vpop.f32.mrf.mxu0
    %v107 = vadd.f32 0.0, %v106
    %108 = vdwg.mxu0
    %v109 = vand.u32 %v59, 4294901760
    %v110 = vsub.f32 %v59, %v109
    %v111 = vand.u32 %v110, 4294901760
    %v112 = vsub.f32 %v110, %v111
    %v113 = vand.u32 %v112, 4294901760
    %114 = vmatpush.msra.mxu0 %v113
    %v115 = vand.u32 %v58, 4294901760
    %v116 = vsub.f32 %v58, %v115
    %v117 = vand.u32 %v116, 4294901760
    %v118 = vsub.f32 %v116, %v117
    %v119 = vand.u32 %v118, 4294901760
    %120 = vmatpush.msra.mxu0 %v119
    %v121 = vand.u32 %v57, 4294901760
    %v122 = vsub.f32 %v57, %v121
    %v123 = vand.u32 %v122, 4294901760
    %v124 = vsub.f32 %v122, %v123
    %v125 = vand.u32 %v124, 4294901760
    %126 = vmatpush.msra.mxu0 %v125
    %v127 = vand.u32 %v56, 4294901760
    %v128 = vsub.f32 %v56, %v127
    %v129 = vand.u32 %v128, 4294901760
    %v130 = vsub.f32 %v128, %v129
    %v131 = vand.u32 %v130, 4294901760
    %132 = vmatpush.msra.mxu0 %v131
    %v133 = vand.u32 %v55, 4294901760
    %v134 = vsub.f32 %v55, %v133
    %v135 = vand.u32 %v134, 4294901760
    %v136 = vsub.f32 %v134, %v135
    %v137 = vand.u32 %v136, 4294901760
    %138 = vmatpush.msra.mxu0 %v137
    %v139 = vand.u32 %v54, 4294901760
    %v140 = vsub.f32 %v54, %v139
    %v141 = vand.u32 %v140, 4294901760
    %v142 = vsub.f32 %v140, %v141
    %v143 = vand.u32 %v142, 4294901760
    %144 = vmatpush.msra.mxu0 %v143
    %v145 = vand.u32 %v53, 4294901760
    %v146 = vsub.f32 %v53, %v145
    %v147 = vand.u32 %v146, 4294901760
    %v148 = vsub.f32 %v146, %v147
    %v149 = vand.u32 %v148, 4294901760
    %150 = vmatpush.msra.mxu0 %v149
    %v151 = vand.u32 %v52, 4294901760
    %v152 = vsub.f32 %v52, %v151
    %v153 = vand.u32 %v152, 4294901760
    %v154 = vsub.f32 %v152, %v153
    %v155 = vand.u32 %v154, 4294901760
    %156 = vmatpush.msra.mxu0 %v155
    %v157 = vand.u32 %v51, 4294901760
    %v158 = vsub.f32 %v51, %v157
    %v159 = vand.u32 %v158, 4294901760
    %v160 = vsub.f32 %v158, %v159
    %v161 = vand.u32 %v160, 4294901760
    %162 = vmatpush.msra.mxu0 %v161
    %v163 = vand.u32 %v50, 4294901760
    %v164 = vsub.f32 %v50, %v163
    %v165 = vand.u32 %v164, 4294901760
    %v166 = vsub.f32 %v164, %v165
    %v167 = vand.u32 %v166, 4294901760
    %168 = vmatpush.msra.mxu0 %v167
    %v169 = vand.u32 %v49, 4294901760
    %v170 = vsub.f32 %v49, %v169
    %v171 = vand.u32 %v170, 4294901760
    %v172 = vsub.f32 %v170, %v171
    %v173 = vand.u32 %v172, 4294901760
    %174 = vmatpush.msra.mxu0 %v173
    %v175 = vand.u32 %v48, 4294901760
    %v176 = vsub.f32 %v48, %v175
    %v177 = vand.u32 %v176, 4294901760
    %v178 = vsub.f32 %v176, %v177
    %v179 = vand.u32 %v178, 4294901760
    %180 = vmatpush.msra.mxu0 %v179
    %v181 = vand.u32 %v47, 4294901760
    %v182 = vsub.f32 %v47, %v181
    %v183 = vand.u32 %v182, 4294901760
    %v184 = vsub.f32 %v182, %v183
    %v185 = vand.u32 %v184, 4294901760
    %186 = vmatpush.msra.mxu0 %v185
    %v187 = vand.u32 %v46, 4294901760
    %v188 = vsub.f32 %v46, %v187
    %v189 = vand.u32 %v188, 4294901760
    %v190 = vsub.f32 %v188, %v189
    %v191 = vand.u32 %v190, 4294901760
    %192 = vmatpush.msra.mxu0 %v191
    %v193 = vand.u32 %v45, 4294901760
    %v194 = vsub.f32 %v45, %v193
    %v195 = vand.u32 %v194, 4294901760
    %v196 = vsub.f32 %v194, %v195
    %v197 = vand.u32 %v196, 4294901760
    %198 = vmatpush.msra.mxu0 %v197
    %v199 = vand.u32 %v44, 4294901760
    %v200 = vsub.f32 %v44, %v199
    %v201 = vand.u32 %v200, 4294901760
    %v202 = vsub.f32 %v200, %v201
    %v203 = vand.u32 %v202, 4294901760
    %204 = vmatpush.msra.mxu0 %v203
    %v205 = vand.u32 %v42, 4294901760
    %206 = vmatmul.f32.gmra.mxu0 %v205
    %v207 = vpop.f32.mrf.mxu0
    %v208 = vadd.f32 %v99, %v207
    %v209 = vand.u32 %v43, 4294901760
    %210 = vmatmul.f32.gmra.mxu0 %v209
    %v211 = vpop.f32.mrf.mxu0
    %v212 = vadd.f32 %v107, %v211
    %213 = vdwg.mxu0
    %v214 = vand.u32 %v59, 4294901760
    %v215 = vsub.f32 %v59, %v214
    %216 = vmatpush.msra.mxu0 %v215
    %v217 = vand.u32 %v58, 4294901760
    %v218 = vsub.f32 %v58, %v217
    %219 = vmatpush.msra.mxu0 %v218
    %v220 = vand.u32 %v57, 4294901760
    %v221 = vsub.f32 %v57, %v220
    %222 = vmatpush.msra.mxu0 %v221
    %v223 = vand.u32 %v56, 4294901760
    %v224 = vsub.f32 %v56, %v223
    %225 = vmatpush.msra.mxu0 %v224
    %v226 = vand.u32 %v55, 4294901760
    %v227 = vsub.f32 %v55, %v226
    %228 = vmatpush.msra.mxu0 %v227
    %v229 = vand.u32 %v54, 4294901760
    %v230 = vsub.f32 %v54, %v229
    %231 = vmatpush.msra.mxu0 %v230
    %v232 = vand.u32 %v53, 4294901760
    %v233 = vsub.f32 %v53, %v232
    %234 = vmatpush.msra.mxu0 %v233
    %v235 = vand.u32 %v52, 4294901760
    %v236 = vsub.f32 %v52, %v235
    %237 = vmatpush.msra.mxu0 %v236
    %v238 = vand.u32 %v51, 4294901760
    %v239 = vsub.f32 %v51, %v238
    %240 = vmatpush.msra.mxu0 %v239
    %v241 = vand.u32 %v50, 4294901760
    %v242 = vsub.f32 %v50, %v241
    %243 = vmatpush.msra.mxu0 %v242
    %v244 = vand.u32 %v49, 4294901760
    %v245 = vsub.f32 %v49, %v244
    %246 = vmatpush.msra.mxu0 %v245
    %v247 = vand.u32 %v48, 4294901760
    %v248 = vsub.f32 %v48, %v247
    %249 = vmatpush.msra.mxu0 %v248
    %v250 = vand.u32 %v47, 4294901760
    %v251 = vsub.f32 %v47, %v250
    %252 = vmatpush.msra.mxu0 %v251
    %v253 = vand.u32 %v46, 4294901760
    %v254 = vsub.f32 %v46, %v253
    %255 = vmatpush.msra.mxu0 %v254
    %v256 = vand.u32 %v45, 4294901760
    %v257 = vsub.f32 %v45, %v256
    %258 = vmatpush.msra.mxu0 %v257
    %v259 = vand.u32 %v44, 4294901760
    %v260 = vsub.f32 %v44, %v259
    %261 = vmatpush.msra.mxu0 %v260
    %v262 = vand.u32 %v42, 4294901760
    %v263 = vsub.f32 %v42, %v262
    %264 = vmatmul.f32.gmra.mxu0 %v263
    %v265 = vpop.f32.mrf.mxu0
    %v266 = vadd.f32 %v208, %v265
    %v267 = vand.u32 %v43, 4294901760
    %v268 = vsub.f32 %v43, %v267
    %269 = vmatmul.f32.gmra.mxu0 %v268
    %v270 = vpop.f32.mrf.mxu0
    %v271 = vadd.f32 %v212, %v270
    %272 = vdwg.mxu0
    %v273 = vand.u32 %v59, 4294901760
    %274 = vmatpush.msra.mxu0 %v273
    %v275 = vand.u32 %v58, 4294901760
    %276 = vmatpush.msra.mxu0 %v275
    %v277 = vand.u32 %v57, 4294901760
    %278 = vmatpush.msra.mxu0 %v277
    %v279 = vand.u32 %v56, 4294901760
    %280 = vmatpush.msra.mxu0 %v279
    %v281 = vand.u32 %v55, 4294901760
    %282 = vmatpush.msra.mxu0 %v281
    %v283 = vand.u32 %v54, 4294901760
    %284 = vmatpush.msra.mxu0 %v283
    %v285 = vand.u32 %v53, 4294901760
    %286 = vmatpush.msra.mxu0 %v285
    %v287 = vand.u32 %v52, 4294901760
    %288 = vmatpush.msra.mxu0 %v287
    %v289 = vand.u32 %v51, 4294901760
    %290 = vmatpush.msra.mxu0 %v289
    %v291 = vand.u32 %v50, 4294901760
    %292 = vmatpush.msra.mxu0 %v291
    %v293 = vand.u32 %v49, 4294901760
    %294 = vmatpush.msra.mxu0 %v293
    %v295 = vand.u32 %v48, 4294901760
    %296 = vmatpush.msra.mxu0 %v295
    %v297 = vand.u32 %v47, 4294901760
    %298 = vmatpush.msra.mxu0 %v297
    %v299 = vand.u32 %v46, 4294901760
    %300 = vmatpush.msra.mxu0 %v299
    %v301 = vand.u32 %v45, 4294901760
    %302 = vmatpush.msra.mxu0 %v301
    %v303 = vand.u32 %v44, 4294901760
    %304 = vmatpush.msra.mxu0 %v303
    %v305 = vand.u32 %v42, 4294901760
    %v306 = vsub.f32 %v42, %v305
    %v307 = vand.u32 %v306, 4294901760
    %308 = vmatmul.f32.gmra.mxu0 %v307
    %v309 = vpop.f32.mrf.mxu0
    %v310 = vadd.f32 %v266, %v309
    %v311 = vand.u32 %v43, 4294901760
    %v312 = vsub.f32 %v43, %v311
    %v313 = vand.u32 %v312, 4294901760
    %314 = vmatmul.f32.gmra.mxu0 %v313
    %v315 = vpop.f32.mrf.mxu0
    %v316 = vadd.f32 %v271, %v315
    %317 = vdwg.mxu0
    %v318 = vand.u32 %v59, 4294901760
    %v319 = vsub.f32 %v59, %v318
    %v320 = vand.u32 %v319, 4294901760
    %321 = vmatpush.msra.mxu0 %v320
    %v322 = vand.u32 %v58, 4294901760
    %v323 = vsub.f32 %v58, %v322
    %v324 = vand.u32 %v323, 4294901760
    %325 = vmatpush.msra.mxu0 %v324
    %v326 = vand.u32 %v57, 4294901760
    %v327 = vsub.f32 %v57, %v326
    %v328 = vand.u32 %v327, 4294901760
    %329 = vmatpush.msra.mxu0 %v328
    %v330 = vand.u32 %v56, 4294901760
    %v331 = vsub.f32 %v56, %v330
    %v332 = vand.u32 %v331, 4294901760
    %333 = vmatpush.msra.mxu0 %v332
    %v334 = vand.u32 %v55, 4294901760
    %v335 = vsub.f32 %v55, %v334
    %v336 = vand.u32 %v335, 4294901760
    %337 = vmatpush.msra.mxu0 %v336
    %v338 = vand.u32 %v54, 4294901760
    %v339 = vsub.f32 %v54, %v338
    %v340 = vand.u32 %v339, 4294901760
    %341 = vmatpush.msra.mxu0 %v340
    %v342 = vand.u32 %v53, 4294901760
    %v343 = vsub.f32 %v53, %v342
    %v344 = vand.u32 %v343, 4294901760
    %345 = vmatpush.msra.mxu0 %v344
    %v346 = vand.u32 %v52, 4294901760
    %v347 = vsub.f32 %v52, %v346
    %v348 = vand.u32 %v347, 4294901760
    %349 = vmatpush.msra.mxu0 %v348
    %v350 = vand.u32 %v51, 4294901760
    %v351 = vsub.f32 %v51, %v350
    %v352 = vand.u32 %v351, 4294901760
    %353 = vmatpush.msra.mxu0 %v352
    %v354 = vand.u32 %v50, 4294901760
    %v355 = vsub.f32 %v50, %v354
    %v356 = vand.u32 %v355, 4294901760
    %357 = vmatpush.msra.mxu0 %v356
    %v358 = vand.u32 %v49, 4294901760
    %v359 = vsub.f32 %v49, %v358
    %v360 = vand.u32 %v359, 4294901760
    %361 = vmatpush.msra.mxu0 %v360
    %v362 = vand.u32 %v48, 4294901760
    %v363 = vsub.f32 %v48, %v362
    %v364 = vand.u32 %v363, 4294901760
    %365 = vmatpush.msra.mxu0 %v364
    %v366 = vand.u32 %v47, 4294901760
    %v367 = vsub.f32 %v47, %v366
    %v368 = vand.u32 %v367, 4294901760
    %369 = vmatpush.msra.mxu0 %v368
    %v370 = vand.u32 %v46, 4294901760
    %v371 = vsub.f32 %v46, %v370
    %v372 = vand.u32 %v371, 4294901760
    %373 = vmatpush.msra.mxu0 %v372
    %v374 = vand.u32 %v45, 4294901760
    %v375 = vsub.f32 %v45, %v374
    %v376 = vand.u32 %v375, 4294901760
    %377 = vmatpush.msra.mxu0 %v376
    %v378 = vand.u32 %v44, 4294901760
    %v379 = vsub.f32 %v44, %v378
    %v380 = vand.u32 %v379, 4294901760
    %381 = vmatpush.msra.mxu0 %v380
    %v382 = vand.u32 %v42, 4294901760
    %383 = vmatmul.f32.gmra.mxu0 %v382
    %v384 = vpop.f32.mrf.mxu0
    %v385 = vadd.f32 %v310, %v384
    %v386 = vand.u32 %v43, 4294901760
    %387 = vmatmul.f32.gmra.mxu0 %v386
    %v388 = vpop.f32.mrf.mxu0
    %v389 = vadd.f32 %v316, %v388
    %390 = vdwg.mxu0
    %v391 = vand.u32 %v59, 4294901760
    %392 = vmatpush.msra.mxu0 %v391
    %v393 = vand.u32 %v58, 4294901760
    %394 = vmatpush.msra.mxu0 %v393
    %v395 = vand.u32 %v57, 4294901760
    %396 = vmatpush.msra.mxu0 %v395
    %v397 = vand.u32 %v56, 4294901760
    %398 = vmatpush.msra.mxu0 %v397
    %v399 = vand.u32 %v55, 4294901760
    %400 = vmatpush.msra.mxu0 %v399
    %v401 = vand.u32 %v54, 4294901760
    %402 = vmatpush.msra.mxu0 %v401
    %v403 = vand.u32 %v53, 4294901760
    %404 = vmatpush.msra.mxu0 %v403
    %v405 = vand.u32 %v52, 4294901760
    %406 = vmatpush.msra.mxu0 %v405
    %v407 = vand.u32 %v51, 4294901760
    %408 = vmatpush.msra.mxu0 %v407
    %v409 = vand.u32 %v50, 4294901760
    %410 = vmatpush.msra.mxu0 %v409
    %v411 = vand.u32 %v49, 4294901760
    %412 = vmatpush.msra.mxu0 %v411
    %v413 = vand.u32 %v48, 4294901760
    %414 = vmatpush.msra.mxu0 %v413
    %v415 = vand.u32 %v47, 4294901760
    %416 = vmatpush.msra.mxu0 %v415
    %v417 = vand.u32 %v46, 4294901760
    %418 = vmatpush.msra.mxu0 %v417
    %v419 = vand.u32 %v45, 4294901760
    %420 = vmatpush.msra.mxu0 %v419
    %v421 = vand.u32 %v44, 4294901760
    %422 = vmatpush.msra.mxu0 %v421
    %v423 = vand.u32 %v42, 4294901760
    %424 = vmatmul.f32.gmra.mxu0 %v423
    %v425 = vpop.f32.mrf.mxu0
    %v426 = vadd.f32 %v385, %v425
    %v427 = vand.u32 %v43, 4294901760
    %428 = vmatmul.f32.gmra.mxu0 %v427
    %v429 = vpop.f32.mrf.mxu0
    %v430 = vadd.f32 %v389, %v429
    %431 = vdwg.mxu0
    %432 = vst [vmem:[#allocation5] sm:$0xff] %v426
    %433 = vst [vmem:[#allocation5 + $0x8] sm:$0xff] %v430
    // Predicated region
    $region14: #{tpu_custom_call.1} parent=1 // pred_check
      _
    $region15: #{tpu_custom_call.1} parent=1 // pred_check_branch
      %435 = sbr.rel (0) target = $region17
    $region16: #{tpu_custom_call.1} parent=1 // pred_region
      %437 = vsyncadd [#allocation4], 0
      %s438 = sshll.u32 [#allocation5], 4
      %s439 = int_to_ptr.vmem [resolvable:$true] %s438
      %s440 = sshll.u32 %s2, 4
      %s441 = int_to_ptr.hbm [resolvable:$true] %s440
      %446 = dma.vmem_to_hbm [thread:$0]  %s439, 256, %s441, [#allocation4], 128, 128, 8
    $region17: #{tpu_custom_call.1} parent=1 // pred_fallthru
      _
    // Predicated region
    $region18: #{tpu_custom_call.1} parent=1 // pred_check
      _
    $region19: #{tpu_custom_call.1} parent=1 // pred_check_branch
      %448 = sbr.rel (0) target = $region21
    $region20: #{tpu_custom_call.1} parent=1 // pred_region
      %450 = dma.done [#allocation4], 256
    $region21: #{tpu_custom_call.1} parent=1 // pred_fallthru
      _
    %451 = vsyncpa [#allocation3], 1
    %452 = vsyncpa [#allocation4], 1

</llo_original>
